<compile_context>
chip_gen: v6e
topology: v6e:2x2x1
jax: 0.10.0
libtpu: 0.0.40
codegen_flags: <defaults>
</compile_context>

<pallas_src>
import math

import jax
import jax.numpy as jnp
from jax import lax
from jax.experimental import pallas as pl
from jax.experimental.pallas import tpu as pltpu


# ---------------------------------------------------------------------------
# Kernels
# ---------------------------------------------------------------------------
def _make_kv_kernel(compute_dtype):
    """One-shot prologue: pathway_features -> fused K|V projection."""
    cdt = compute_dtype

    def kernel(path_ref, wpa_ref, bpa_ref, wkv_ref, bkv_ref, k_ref, v_ref):
        def mm(x, w):
            return lax.dot_general(x, w, (((1,), (0,)), ((), ())),
                                   preferred_element_type=jnp.float32)

        # pathway_features = relu(pathway_fc(pathway))              [B, H] f32
        paf = jnp.maximum(mm(path_ref[...].astype(cdt), wpa_ref[...])
                          + bpa_ref[...], 0.0)
        # Fused [K | V] projection: one wide MXU call.                [B, 2H]
        kv = mm(paf.astype(cdt), wkv_ref[...]) + bkv_ref[...]
        H = k_ref.shape[-1]
        k_ref[...] = kv[:, :H].astype(k_ref.dtype)
        v_ref[...] = kv[:, H:].astype(v_ref.dtype)

    return kernel


def _make_attn_kernel(compute_dtype, inv_sqrt_dk, approx_recip=True):
    """Per-batch-tile kernel: protein_fc -> Q -> attention over resident K/V."""
    cdt = compute_dtype

    def kernel(prot_ref, wp_ref, bp_ref, wq_ref, bq_ref, k_ref, v_ref,
               z_ref, pf_ref):
        def mm(x, w):
            return lax.dot_general(x, w, (((1,), (0,)), ((), ())),
                                   preferred_element_type=jnp.float32)

        # protein_features = relu(protein_fc(protein_tile))        [TB, H] f32
        pf = jnp.maximum(mm(prot_ref[...].astype(cdt), wp_ref[...])
                         + bp_ref[...], 0.0)

        # Q projection; 1/sqrt(d_k) folded in as a compile-time constant.
        q = (mm(pf.astype(cdt), wq_ref[...]) + bq_ref[...]) * inv_sqrt_dk

        # scores = Q @ K^T -- contract last dims, no transpose; K/V arrive
        # already in the compute dtype, so no per-step cast for them.
        scores = lax.dot_general(q.astype(cdt), k_ref[...],
                                 (((1,), (1,)), ((), ())),
                                 preferred_element_type=jnp.float32)  # [TB, B]

        # Numerically-stable softmax; denominator reciprocal on the EUP slot.
        m = jnp.max(scores, axis=-1, keepdims=True)
        e = jnp.exp(scores - m)
        denom = jnp.sum(e, axis=-1, keepdims=True)
        if approx_recip:
            attn = e * pl.reciprocal(denom, approx=True)
        else:
            attn = e / denom

        z = lax.dot_general(attn.astype(cdt), v_ref[...],
                            (((1,), (0,)), ((), ())),
                            preferred_element_type=jnp.float32)       # [TB, H]

        # Two full-block stores (concat done lane-dense in the wrapper).
        z_ref[...] = z.astype(z_ref.dtype)
        pf_ref[...] = pf.astype(pf_ref.dtype)

    return kernel


# ---------------------------------------------------------------------------
# Tiling / VMEM budgeting
# ---------------------------------------------------------------------------
def _vmem_capacity_bytes():
    try:
        return int(pltpu.get_tpu_info().vmem_capacity_bytes)
    except Exception:
        return 64 << 20   # conservative: v7x per-TensorCore VMEM


def _estimate_step_bytes(TB, B, P, H, w_itemsize=2):
    """Rough per-grid-step VMEM footprint of the main attention kernel."""
    # Resident, single-buffered constants: wp, wq, biases, K, V.
    const = (P * H + H * H) * w_itemsize + 2 * H * 4 + 2 * B * H * w_itemsize
    # Double-buffered pipelined blocks: protein tile in, two [TB, H] f32 outs.
    pipelined = 2 * (TB * P * 4 + 2 * TB * H * 4)
    # Live f32 intermediates: pf/q/z + scores/e/attn (upper bound).
    live = 3 * TB * H * 4 + 3 * TB * B * 4
    return const + pipelined + live


def _pick_batch_tile(B, P, H, vmem_capacity):
    """Largest multiple-of-8 batch tile that fits the VMEM budget, capped so
    that B >= 16 always yields at least 2 grid steps (v7x dual-TC sharding)."""
    budget = min(vmem_capacity // 3, 40 << 20)
    b_pad8 = -(-B // 8) * 8
    cap = min(512, b_pad8)
    if B >= 16:
        half = -(-B // 2)
        cap = min(cap, max(8, -(-half // 8) * 8))
    best = 8
    tb = 8
    while tb <= cap:
        if _estimate_step_bytes(tb, B, P, H) <= budget:
            best = tb
        tb += 8
    return best


# ---------------------------------------------------------------------------
# Wrapper
# ---------------------------------------------------------------------------
def feature_attention_forward(protein_data, pathway_data, params,
                               matmul_dtype=jnp.bfloat16, approx_recip=True):
    B, P = protein_data.shape
    _, PW = pathway_data.shape
    H = params["wq"].shape[1]

    cast_w = lambda w: w.astype(matmul_dtype)
    b2d = lambda b: b.reshape(1, -1).astype(jnp.float32)

    # ----- Prologue: pathway branch computed exactly once (hoisted). -----
    wkv = jnp.concatenate([params["wk"], params["wv"]], axis=1)   # [H, 2H]
    bkv = jnp.concatenate([params["bk"], params["bv"]])           # [2H]

    kv_args = (pathway_data.astype(jnp.float32),
               cast_w(params["wpa"]), b2d(params["bpa"]),
               cast_w(wkv), b2d(bkv))

    def _full_spec(arr):
        nd = arr.ndim
        return pl.BlockSpec(arr.shape, lambda i, _nd=nd: (0,) * _nd)

    kv_flops = 2 * (B * PW * H + 2 * B * H * H)
    kv_bytes = (sum(int(a.size) * a.dtype.itemsize for a in kv_args)
                + 2 * B * H * jnp.dtype(matmul_dtype).itemsize)

    k_mat, v_mat = pl.pallas_call(
        _make_kv_kernel(matmul_dtype),
        grid=(1,),
        in_specs=[_full_spec(a) for a in kv_args],
        out_specs=[pl.BlockSpec((B, H), lambda i: (0, 0)),
                   pl.BlockSpec((B, H), lambda i: (0, 0))],
        out_shape=(jax.ShapeDtypeStruct((B, H), matmul_dtype),
                   jax.ShapeDtypeStruct((B, H), matmul_dtype)),
        cost_estimate=pl.CostEstimate(flops=kv_flops, transcendentals=0,
                                      bytes_accessed=kv_bytes),
    )(*kv_args)

    # ----- Main kernel: batch-tiled protein branch + attention. -----
    vmem_cap = _vmem_capacity_bytes()
    TB = _pick_batch_tile(B, P, H, vmem_cap)
    n_tiles = -(-B // TB)
    B_pad = n_tiles * TB

    prot = protein_data.astype(jnp.float32)
    if B_pad != B:
        # cdiv grid with zero-padded tail rows; outputs sliced back below.
        prot = jnp.pad(prot, ((0, B_pad - B), (0, 0)))

    step_bytes = _estimate_step_bytes(TB, B, P, H)
    vmem_limit = int(min(48 << 20, max(16 << 20, 2 * step_bytes + (2 << 20))))

    attn_args = (prot,
                 cast_w(params["wp"]), b2d(params["bp"]),
                 cast_w(params["wq"]), b2d(params["bq"]),
                 k_mat, v_mat)

    flops = 2 * B_pad * (P * H + H * H + 2 * B * H)
    bytes_accessed = (B_pad * P * 4
                      + (P * H + H * H) * jnp.dtype(matmul_dtype).itemsize
                      + 2 * H * 4
                      + 2 * B * H * jnp.dtype(matmul_dtype).itemsize
                      + 2 * B_pad * H * 4)
    cost = pl.CostEstimate(flops=flops, transcendentals=B_pad * B,
                           bytes_accessed=bytes_accessed)

    kernel = _make_attn_kernel(matmul_dtype, 1.0 / math.sqrt(float(H)),
                               approx_recip)

    def _call(single_buffer_constants):
        def const_spec(arr):
            nd = arr.ndim
            kwargs = {}
            if single_buffer_constants:
                # constant-index blocks: no point double-buffering them
                kwargs["pipeline_mode"] = pl.Buffered(1)
            return pl.BlockSpec(arr.shape, lambda i, _nd=nd: (0,) * _nd,
                                **kwargs)

        in_specs = ([pl.BlockSpec((TB, P), lambda i: (i, 0))]
                    + [const_spec(a) for a in attn_args[1:]])
        out_specs = [pl.BlockSpec((TB, H), lambda i: (i, 0)),
                     pl.BlockSpec((TB, H), lambda i: (i, 0))]
        out_shape = (jax.ShapeDtypeStruct((B_pad, H), jnp.float32),
                     jax.ShapeDtypeStruct((B_pad, H), jnp.float32))
        return pl.pallas_call(
            kernel,
            grid=(n_tiles,),
            in_specs=in_specs,
            out_specs=out_specs,
            out_shape=out_shape,
            compiler_params=pltpu.CompilerParams(
                dimension_semantics=("parallel",),
                vmem_limit_bytes=vmem_limit),
            cost_estimate=cost,
        )(*attn_args)

    try:
        z, pf = _call(True)
    except Exception:
        # pl.Buffered(1) not supported on this jax/libtpu -> default buffering.
        z, pf = _call(False)

    if B_pad != B:
        z, pf = z[:B], pf[:B]

    # torch.cat((Z, protein_features), dim=1)
    return jnp.concatenate([z, pf], axis=1)


# ---------------------------------------------------------------------------
# Params / reference
# ---------------------------------------------------------------------------
def init_params(key, protein_dim, pathway_dim, hidden_dim):
    """Uniform init (roughly torch Linear default). Weights stored as
    [in_dim, out_dim] so kernels do x @ W + b."""
    def linear(k, fan_in, fan_out):
        kw, kb = jax.random.split(k)
        bound = 1.0 / jnp.sqrt(jnp.float32(fan_in))
        w = jax.random.uniform(kw, (fan_in, fan_out), jnp.float32, -bound, bound)
        b = jax.random.uniform(kb, (fan_out,), jnp.float32, -bound, bound)
        return w, b

    k1, k2, k3, k4, k5 = jax.random.split(key, 5)
    wp, bp = linear(k1, protein_dim, hidden_dim)
    wpa, bpa = linear(k2, pathway_dim, hidden_dim)
    wq, bq = linear(k3, hidden_dim, hidden_dim)
    wk, bk = linear(k4, hidden_dim, hidden_dim)
    wv, bv = linear(k5, hidden_dim, hidden_dim)
    return dict(wp=wp, bp=bp, wpa=wpa, bpa=bpa,
                wq=wq, bq=bq, wk=wk, bk=bk, wv=wv, bv=bv)


def _reference(protein_data, pathway_data, p):
    """Pure-JAX f32 reference mirroring the PyTorch forward."""
    pf = jax.nn.relu(protein_data @ p["wp"] + p["bp"])
    paf = jax.nn.relu(pathway_data @ p["wpa"] + p["bpa"])
    q = pf @ p["wq"] + p["bq"]
    k = paf @ p["wk"] + p["bk"]
    v = paf @ p["wv"] + p["bv"]
    scores = (q @ k.T) / jnp.sqrt(jnp.float32(q.shape[-1]))
    attn = jax.nn.softmax(scores, axis=-1)
    z = attn @ v
    return jnp.concatenate([z, pf], axis=1)


if __name__ == "__main__":
    B, PROTEIN_DIM, PATHWAY_DIM, HIDDEN_DIM = 8, 16, 12, 32

    key = jax.random.PRNGKey(0)
    k_prot, k_path, k_params = jax.random.split(key, 3)
    protein_data = jax.random.normal(k_prot, (B, PROTEIN_DIM), jnp.float32)
    pathway_data = jax.random.normal(k_path, (B, PATHWAY_DIM), jnp.float32)
    params = init_params(k_params, PROTEIN_DIM, PATHWAY_DIM, HIDDEN_DIM)

    out = feature_attention_forward(protein_data, pathway_data, params)
    out = jax.block_until_ready(out)

    ref = _reference(protein_data, pathway_data, params)
    assert out.shape == (B, 2 * HIDDEN_DIM)
    # Tolerance accounts for bf16 MXU operands + approx EUP reciprocal
    # (use approx_recip=False / f32 weights if exactness is required).
    assert jnp.allclose(out, ref, atol=5e-2, rtol=5e-2), \
        f"max abs diff {jnp.max(jnp.abs(out - ref))}"

    print("KERNEL_OK")
</pallas_src>

<mosaic_0001>
module attributes {stable_mosaic.version = 11 : i64} {
  func.func @kernel(%arg0: i32, %arg1: memref<8x12xf32, #tpu.memory_space<vmem>>, %arg2: memref<12x32xbf16, #tpu.memory_space<vmem>>, %arg3: memref<1x32xf32, #tpu.memory_space<vmem>>, %arg4: memref<32x64xbf16, #tpu.memory_space<vmem>>, %arg5: memref<1x64xf32, #tpu.memory_space<vmem>>, %arg6: memref<8x32xbf16, #tpu.memory_space<vmem>>, %arg7: memref<8x32xbf16, #tpu.memory_space<vmem>>) attributes {dimension_semantics = [#tpu.dimension_semantics<arbitrary>], iteration_bounds = array<i64: 1>, scalar_prefetch = 0 : i64, scratch_operands = 0 : i64, tpu.core_type = #tpu.core_type<tc>, window_params = [{pipeline_mode = #tpu.pipeline_mode<synchronous>, transform_indices = @transform_0, window_bounds = array<i64: 8, 12>}, {pipeline_mode = #tpu.pipeline_mode<synchronous>, transform_indices = @transform_1, window_bounds = array<i64: 12, 32>}, {pipeline_mode = #tpu.pipeline_mode<synchronous>, transform_indices = @transform_2, window_bounds = array<i64: 1, 32>}, {pipeline_mode = #tpu.pipeline_mode<synchronous>, transform_indices = @transform_3, window_bounds = array<i64: 32, 64>}, {pipeline_mode = #tpu.pipeline_mode<synchronous>, transform_indices = @transform_4, window_bounds = array<i64: 1, 64>}, {pipeline_mode = #tpu.pipeline_mode<synchronous>, transform_indices = @transform_5, window_bounds = array<i64: 8, 32>}, {pipeline_mode = #tpu.pipeline_mode<synchronous>, transform_indices = @transform_6, window_bounds = array<i64: 8, 32>}]} {
    %c0 = arith.constant 0 : index
    %c0_0 = arith.constant 0 : index
    %0 = vector.load %arg1[%c0, %c0_0] : memref<8x12xf32, #tpu.memory_space<vmem>>, vector<8x12xf32>
    %1 = arith.truncf %0 : vector<8x12xf32> to vector<8x12xbf16>
    %c0_1 = arith.constant 0 : index
    %c0_2 = arith.constant 0 : index
    %2 = vector.load %arg2[%c0_1, %c0_2] : memref<12x32xbf16, #tpu.memory_space<vmem>>, vector<12x32xbf16>
    %cst = arith.constant dense<0.000000e+00> : vector<8x32xf32>
    %3 = tpu.matmul %1, %2, %cst {dimension_numbers = #tpu.dot_dimension_numbers<[1], [0], [0], [1], [0, 0, 1, 1], [], []>} : vector<8x12xbf16>, vector<12x32xbf16>, vector<8x32xf32> -> vector<8x32xf32>
    %c0_3 = arith.constant 0 : index
    %c0_4 = arith.constant 0 : index
    %4 = vector.load %arg3[%c0_3, %c0_4] : memref<1x32xf32, #tpu.memory_space<vmem>>, vector<1x32xf32>
    %5 = vector.broadcast %4 : vector<1x32xf32> to vector<8x32xf32>
    %6 = arith.addf %3, %5 : vector<8x32xf32>
    %cst_5 = arith.constant 0.000000e+00 : f32
    %7 = vector.broadcast %cst_5 : f32 to vector<8x32xf32>
    %8 = arith.maximumf %6, %7 : vector<8x32xf32>
    %9 = arith.truncf %8 : vector<8x32xf32> to vector<8x32xbf16>
    %c0_6 = arith.constant 0 : index
    %c0_7 = arith.constant 0 : index
    %10 = vector.load %arg4[%c0_6, %c0_7] : memref<32x64xbf16, #tpu.memory_space<vmem>>, vector<32x64xbf16>
    %cst_8 = arith.constant dense<0.000000e+00> : vector<8x64xf32>
    %11 = tpu.matmul %9, %10, %cst_8 {dimension_numbers = #tpu.dot_dimension_numbers<[1], [0], [0], [1], [0, 0, 1, 1], [], []>} : vector<8x32xbf16>, vector<32x64xbf16>, vector<8x64xf32> -> vector<8x64xf32>
    %c0_9 = arith.constant 0 : index
    %c0_10 = arith.constant 0 : index
    %12 = vector.load %arg5[%c0_9, %c0_10] : memref<1x64xf32, #tpu.memory_space<vmem>>, vector<1x64xf32>
    %13 = vector.broadcast %12 : vector<1x64xf32> to vector<8x64xf32>
    %14 = arith.addf %11, %13 : vector<8x64xf32>
    %15 = vector.extract_strided_slice %14 {offsets = [0, 0], sizes = [8, 32], strides = [1, 1]} : vector<8x64xf32> to vector<8x32xf32>
    %16 = arith.truncf %15 : vector<8x32xf32> to vector<8x32xbf16>
    %c0_11 = arith.constant 0 : index
    %c0_12 = arith.constant 0 : index
    %17 = vector.load %arg6[%c0_11, %c0_12] : memref<8x32xbf16, #tpu.memory_space<vmem>>, vector<8x32xbf16>
    tpu.vector_store %arg6[%c0_11, %c0_12], %16 {strides = array<i32>} : memref<8x32xbf16, #tpu.memory_space<vmem>>, vector<8x32xbf16>,
    %18 = vector.extract_strided_slice %14 {offsets = [0, 32], sizes = [8, 32], strides = [1, 1]} : vector<8x64xf32> to vector<8x32xf32>
    %19 = arith.truncf %18 : vector<8x32xf32> to vector<8x32xbf16>
    %c0_13 = arith.constant 0 : index
    %c0_14 = arith.constant 0 : index
    %20 = vector.load %arg7[%c0_13, %c0_14] : memref<8x32xbf16, #tpu.memory_space<vmem>>, vector<8x32xbf16>
    tpu.vector_store %arg7[%c0_13, %c0_14], %19 {strides = array<i32>} : memref<8x32xbf16, #tpu.memory_space<vmem>>, vector<8x32xbf16>,
    return
  }
  func.func @transform_0(%arg0: i32) -> (i32, i32) {
    %c0_i32 = arith.constant 0 : i32
    %c0_i32_0 = arith.constant 0 : i32
    %c0_i32_1 = arith.constant 0 : i32
    return %c0_i32, %c0_i32_0 : i32, i32
  }
  func.func @transform_1(%arg0: i32) -> (i32, i32) {
    %c0_i32 = arith.constant 0 : i32
    %c0_i32_0 = arith.constant 0 : i32
    %c0_i32_1 = arith.constant 0 : i32
    return %c0_i32, %c0_i32_0 : i32, i32
  }
  func.func @transform_2(%arg0: i32) -> (i32, i32) {
    %c0_i32 = arith.constant 0 : i32
    %c0_i32_0 = arith.constant 0 : i32
    %c0_i32_1 = arith.constant 0 : i32
    return %c0_i32, %c0_i32_0 : i32, i32
  }
  func.func @transform_3(%arg0: i32) -> (i32, i32) {
    %c0_i32 = arith.constant 0 : i32
    %c0_i32_0 = arith.constant 0 : i32
    %c0_i32_1 = arith.constant 0 : i32
    return %c0_i32, %c0_i32_0 : i32, i32
  }
  func.func @transform_4(%arg0: i32) -> (i32, i32) {
    %c0_i32 = arith.constant 0 : i32
    %c0_i32_0 = arith.constant 0 : i32
    %c0_i32_1 = arith.constant 0 : i32
    return %c0_i32, %c0_i32_0 : i32, i32
  }
  func.func @transform_5(%arg0: i32) -> (i32, i32) {
    %c0_i32 = arith.constant 0 : i32
    %c0_i32_0 = arith.constant 0 : i32
    %c0_i32_1 = arith.constant 0 : i32
    return %c0_i32, %c0_i32_0 : i32, i32
  }
  func.func @transform_6(%arg0: i32) -> (i32, i32) {
    %c0_i32 = arith.constant 0 : i32
    %c0_i32_0 = arith.constant 0 : i32
    %c0_i32_1 = arith.constant 0 : i32
    return %c0_i32, %c0_i32_0 : i32, i32
  }
}

</mosaic_0001>

<llo_original>
// kernel: tpu_custom_call.1
$region0: #{tpu_custom_call.1}
  #allocation0 [shape = 'u32[]', space=smem, size = 0x4, offset = 0x4, fixed_abs, tag = 'smem constant byte address 0x4 - core index']
  #allocation1 [shape = 'u32[144,128]{1,0:T(1,128)}', space=vmem, size = 0x12000, scoped, tag = 'internal scratch']
  %s0 = inlined_call_operand.hbm [shape: f32[8,12], index: 0, kind: input, shape index: {}]
  %s1 = inlined_call_operand.hbm [shape: bf16[12,32], index: 1, kind: input, shape index: {}]
  %s2 = inlined_call_operand.vmem [shape: f32[1,32], index: 2, kind: input, shape index: {}]
  %s3 = inlined_call_operand.hbm [shape: bf16[32,64], index: 3, kind: input, shape index: {}]
  %s4 = inlined_call_operand.vmem [shape: f32[1,64], index: 4, kind: input, shape index: {}]
  %s5 = inlined_call_operand.hbm [shape: bf16[8,32], index: 5, kind: output, shape index: {0}]
  %s6 = inlined_call_operand.hbm [shape: bf16[8,32], index: 6, kind: output, shape index: {1}]
  %7 = xla_tuple %s5, %s6
  %s8 = sld [smem:[#allocation0]]
  $region50: #{tpu_custom_call.1} parent=0
    _
  %s10 = ssub.s32 1, %s8
  %s11 = scalar_select 0, %s10, %s8
  $region1: #{tpu_custom_call.1} parent=0
    #allocation2 [shape = 'u8[4096]{0}', space=vmem, size = 0x1000, scoped, tag = 'input window, operand 0, single buffered']
    #allocation3 [shape = 's32[1]{0}', space=sflag, size = 0x4, scoped, tag = 'scoped memory for tpu_custom_call.1']
    #allocation4 [shape = 's32[1]{0}', space=sflag, size = 0x4, scoped, tag = 'scoped memory for tpu_custom_call.1']
    #allocation5 [shape = 'u8[4096]{0}', space=vmem, size = 0x1000, scoped, tag = 'input window, operand 1, single buffered']
    #allocation6 [shape = 's32[1]{0}', space=sflag, size = 0x4, scoped, tag = 'scoped memory for tpu_custom_call.1']
    #allocation7 [shape = 'u8[8192]{0}', space=vmem, size = 0x2000, scoped, tag = 'input window, operand 3, single buffered']
    #allocation8 [shape = 'u8[2048]{0}', space=vmem, size = 0x800, scoped, tag = 'output window, operand 0, single buffered']
    #allocation9 [shape = 'u8[2048]{0}', space=vmem, size = 0x800, scoped, tag = 'output window, operand 1, single buffered']
    #allocation10 [shape = 's32[1]{0}', space=sflag, size = 0x4, scoped, tag = 'scoped memory for tpu_custom_call.1']
    %12 = vsyncpa [#allocation3], 0
    %13 = vsyncpa [#allocation6], 0
    %14 = vsyncpa [#allocation4], 0
    %15 = vsyncpa [#allocation10], 0
    // Predicated region
    $region2: #{tpu_custom_call.1} parent=1 // pred_check
      _
    $region3: #{tpu_custom_call.1} parent=1 // pred_check_branch
      %17 = sbr.rel (0) target = $region5
    $region4: #{tpu_custom_call.1} parent=1 // pred_region
      %s19 = ssub.s32 128, 128
      %20 = vsyncadd [#allocation3], %s19
      %s22 = sshll.u32 [#allocation2], 4
      %s23 = int_to_ptr.vmem [resolvable:$true] %s22
      %25 = dma.hbm_to_vmem [thread:$0]  %s0, 128, %s23, [#allocation3]
    $region5: #{tpu_custom_call.1} parent=1 // pred_fallthru
      _
    // Predicated region
    $region6: #{tpu_custom_call.1} parent=1 // pred_check
      _
    $region7: #{tpu_custom_call.1} parent=1 // pred_check_branch
      %27 = sbr.rel (0) target = $region9
    $region8: #{tpu_custom_call.1} parent=1 // pred_region
      %s29 = ssub.s32 128, 128
      %30 = vsyncadd [#allocation6], %s29
      %s31 = sshll.u32 [#allocation5], 4
      %s32 = int_to_ptr.vmem [resolvable:$true] %s31
      %37 = dma.hbm_to_vmem [thread:$0]  %s1, 128, %s32, [#allocation6], 64, 64, 4
    $region9: #{tpu_custom_call.1} parent=1 // pred_fallthru
      _
    // Predicated region
    $region10: #{tpu_custom_call.1} parent=1 // pred_check
      _
    $region11: #{tpu_custom_call.1} parent=1 // pred_check_branch
      %39 = sbr.rel (0) target = $region13
    $region12: #{tpu_custom_call.1} parent=1 // pred_region
      _
    $region13: #{tpu_custom_call.1} parent=1 // pred_fallthru
      _
    // Predicated region
    $region14: #{tpu_custom_call.1} parent=1 // pred_check
      _
    $region15: #{tpu_custom_call.1} parent=1 // pred_check_branch
      %41 = sbr.rel (0) target = $region17
    $region16: #{tpu_custom_call.1} parent=1 // pred_region
      %s43 = ssub.s32 256, 256
      %44 = vsyncadd [#allocation6], %s43
      %s45 = sshll.u32 [#allocation7], 4
      %s46 = int_to_ptr.vmem [resolvable:$true] %s45
      %51 = dma.hbm_to_vmem [thread:$0]  %s3, 256, %s46, [#allocation6], 64, 64, 4
    $region17: #{tpu_custom_call.1} parent=1 // pred_fallthru
      _
    // Predicated region
    $region18: #{tpu_custom_call.1} parent=1 // pred_check
      _
    $region19: #{tpu_custom_call.1} parent=1 // pred_check_branch
      %53 = sbr.rel (0) target = $region21
    $region20: #{tpu_custom_call.1} parent=1 // pred_region
      _
    $region21: #{tpu_custom_call.1} parent=1 // pred_fallthru
      _
    // Predicated region
    $region22: #{tpu_custom_call.1} parent=1 // pred_check
      _
    $region23: #{tpu_custom_call.1} parent=1 // pred_check_branch
      %55 = sbr.rel (0) target = $region25
    $region24: #{tpu_custom_call.1} parent=1 // pred_region
      %56 = dma.done [#allocation3], 128
    $region25: #{tpu_custom_call.1} parent=1 // pred_fallthru
      _
    // Predicated region
    $region26: #{tpu_custom_call.1} parent=1 // pred_check
      _
    $region27: #{tpu_custom_call.1} parent=1 // pred_check_branch
      %58 = sbr.rel (0) target = $region29
    $region28: #{tpu_custom_call.1} parent=1 // pred_region
      %59 = dma.done [#allocation6], 128
    $region29: #{tpu_custom_call.1} parent=1 // pred_fallthru
      _
    // Predicated region
    $region30: #{tpu_custom_call.1} parent=1 // pred_check
      _
    $region31: #{tpu_custom_call.1} parent=1 // pred_check_branch
      %61 = sbr.rel (0) target = $region33
    $region32: #{tpu_custom_call.1} parent=1 // pred_region
      %62 = dma.done [#allocation6], 256
    $region33: #{tpu_custom_call.1} parent=1 // pred_fallthru
      _
    %v64 = vld [vmem:[#allocation2] sm:$0xff]
    %v65 = vpack.c.bf16 %v64, %v64
    %v66 = vld [vmem:[#allocation5] sm:$0xf]
    %v67 = vld [vmem:[#allocation5 + $0x4] sm:$0x3]
    %v68 = vld [vmem:[%s2] sm:$0x1]
    %v70 = vlaneseq
    %v71 = vshrl.u32 %v70, 7
    %v72 = vsub.s32 0, %v71
    %v73 = vrot.slane %v68, %v72
    %v77 = vunpack.c.l.b16 %v66
    %v78 = vunpack.c.l.b16 %v67
    %v79 = vpack.c.b16 %v78, %v77
    %vm80 = vcmask 97280
    %v82 = vsel %vm80, %v65, 0
    %vm84 = vcmask 1045504
    %v86 = vsel %vm84, %v79, 0
    %88 = vmatprep.subr.bf16.mxu0 0
    %89 = vmatpush1.bf16.msra.mxu0 0
    %90 = vmatprep.subr.bf16.mxu0 0
    %91 = vmatpush1.bf16.msra.mxu0 0
    %92 = vmatprep.subr.bf16.mxu0 0
    %93 = vmatpush1.bf16.msra.mxu0 0
    %94 = vmatprep.subr.bf16.mxu0 0
    %95 = vmatpush1.bf16.msra.mxu0 0
    %96 = vmatprep.subr.bf16.mxu0 0
    %97 = vmatpush1.bf16.msra.mxu0 0
    %98 = vmatprep.subr.bf16.mxu0 0
    %99 = vmatpush1.bf16.msra.mxu0 0
    %100 = vmatprep.subr.bf16.mxu0 0
    %101 = vmatpush1.bf16.msra.mxu0 0
    %102 = vmatprep.subr.bf16.mxu0 0
    %103 = vmatpush1.bf16.msra.mxu0 %v86
    %104 = vmatprep.subr.bf16.mxu0 0
    %105 = vmatpush2.bf16.msra.mxu0 0
    %106 = vmatprep.subr.bf16.mxu0 0
    %107 = vmatpush2.bf16.msra.mxu0 0
    %108 = vmatprep.subr.bf16.mxu0 0
    %109 = vmatpush2.bf16.msra.mxu0 0
    %110 = vmatprep.subr.bf16.mxu0 0
    %111 = vmatpush2.bf16.msra.mxu0 0
    %112 = vmatprep.subr.bf16.mxu0 0
    %113 = vmatpush2.bf16.msra.mxu0 0
    %114 = vmatprep.subr.bf16.mxu0 0
    %115 = vmatpush2.bf16.msra.mxu0 0
    %116 = vmatprep.subr.bf16.mxu0 0
    %117 = vmatpush2.bf16.msra.mxu0 0
    %118 = vmatprep.subr.bf16.mxu0 0
    %119 = vmatpush2.bf16.msra.mxu0 0
    %120 = vmatprep.mubr.bf16.mxu0 0
    %121 = vmatmul.mubr.bf16.gmra.mxu0 %v82
    %v122 = vpop.f32.mrf.mxu0
    %v123 = vadd.f32 %v73, %v122
    %v124 = vpop.f32.mrf.mxu0
    %v125 = vpop.f32.mrf.mxu0
    %v126 = vpop.f32.mrf.mxu0
    %127 = vdwg.mxu0
    %v128 = vmax.f32 %v123, 0.0
    %v129 = vpack.c.bf16 %v128, %v128
    %v130 = vld [vmem:[#allocation7] sm:$0xf]
    %v131 = vld [vmem:[#allocation7 + $0x4] sm:$0xf]
    %v132 = vld [vmem:[#allocation7 + $0x8] sm:$0xf]
    %v133 = vld [vmem:[#allocation7 + $0xc] sm:$0xf]
    %v134 = vld [vmem:[%s4] sm:$0x1]
    %v136 = vlaneseq
    %v137 = vshrl.u32 %v136, 7
    %v138 = vsub.s32 0, %v137
    %v139 = vrot.slane %v134, %v138
    %v145 = vunpack.c.l.b16 %v130
    %v146 = vunpack.c.l.b16 %v131
    %v147 = vunpack.c.l.b16 %v132
    %v148 = vunpack.c.l.b16 %v133
    %v149 = vpack.c.b16 %v146, %v145
    %v150 = vpack.c.b16 %v148, %v147
    %vm153 = vcmask 261120
    %v155 = vsel %vm153, %v129, 0
    %157 = vmatprep.subr.bf16.mxu0 0
    %158 = vmatpush1.bf16.msra.mxu0 0
    %159 = vmatprep.subr.bf16.mxu0 0
    %160 = vmatpush1.bf16.msra.mxu0 0
    %161 = vmatprep.subr.bf16.mxu0 0
    %162 = vmatpush1.bf16.msra.mxu0 0
    %163 = vmatprep.subr.bf16.mxu0 0
    %164 = vmatpush1.bf16.msra.mxu0 0
    %165 = vmatprep.subr.bf16.mxu0 0
    %166 = vmatpush1.bf16.msra.mxu0 0
    %167 = vmatprep.subr.bf16.mxu0 0
    %168 = vmatpush1.bf16.msra.mxu0 0
    %169 = vmatprep.subr.bf16.mxu0 0
    %170 = vmatpush1.bf16.msra.mxu0 %v150
    %171 = vmatprep.subr.bf16.mxu0 0
    %172 = vmatpush1.bf16.msra.mxu0 %v149
    %173 = vmatprep.subr.bf16.mxu0 0
    %174 = vmatpush2.bf16.msra.mxu0 0
    %175 = vmatprep.subr.bf16.mxu0 0
    %176 = vmatpush2.bf16.msra.mxu0 0
    %177 = vmatprep.subr.bf16.mxu0 0
    %178 = vmatpush2.bf16.msra.mxu0 0
    %179 = vmatprep.subr.bf16.mxu0 0
    %180 = vmatpush2.bf16.msra.mxu0 0
    %181 = vmatprep.subr.bf16.mxu0 0
    %182 = vmatpush2.bf16.msra.mxu0 0
    %183 = vmatprep.subr.bf16.mxu0 0
    %184 = vmatpush2.bf16.msra.mxu0 0
    %185 = vmatprep.subr.bf16.mxu0 0
    %186 = vmatpush2.bf16.msra.mxu0 0
    %187 = vmatprep.subr.bf16.mxu0 0
    %188 = vmatpush2.bf16.msra.mxu0 0
    %189 = vmatprep.mubr.bf16.mxu0 0
    %190 = vmatmul.mubr.bf16.gmra.mxu0 %v155
    %v191 = vpop.f32.mrf.mxu0
    %v192 = vadd.f32 %v139, %v191
    %v193 = vpop.f32.mrf.mxu0
    %v194 = vpop.f32.mrf.mxu0
    %v195 = vpop.f32.mrf.mxu0
    %196 = vdwg.mxu0
    %v197 = vpack.c.bf16 %v192, %v192
    %vm198 = vcmask 257024
    %199 = vst.msk [vmem:[#allocation8] sm:$0xf] %vm198, %v197
    %v201 = vunpack.c.l.b16 %v197
    %v202 = vpack.c.b16 %v201, %v201
    %203 = vrot.lane.b32.xlu0 %v202, 96
    %v204 = vpop.permute.xlu0 %203
    %206 = vst.msk [vmem:[#allocation9] sm:$0xf] %vm198, %v204
    // Predicated region
    $region34: #{tpu_custom_call.1} parent=1 // pred_check
      _
    $region35: #{tpu_custom_call.1} parent=1 // pred_check_branch
      %208 = sbr.rel (0) target = $region37
    $region36: #{tpu_custom_call.1} parent=1 // pred_region
      %s210 = ssub.s32 64, 64
      %211 = vsyncadd [#allocation4], %s210
      %s213 = sshll.u32 [#allocation8], 4
      %s214 = int_to_ptr.vmem [resolvable:$true] %s213
      %216 = dma.vmem_to_hbm [thread:$0]  %s214, 64, %s5, [#allocation4]
    $region37: #{tpu_custom_call.1} parent=1 // pred_fallthru
      _
    // Predicated region
    $region38: #{tpu_custom_call.1} parent=1 // pred_check
      _
    $region39: #{tpu_custom_call.1} parent=1 // pred_check_branch
      %218 = sbr.rel (0) target = $region41
    $region40: #{tpu_custom_call.1} parent=1 // pred_region
      %s220 = ssub.s32 64, 64
      %221 = vsyncadd [#allocation10], %s220
      %s223 = sshll.u32 [#allocation9], 4
      %s224 = int_to_ptr.vmem [resolvable:$true] %s223
      %226 = dma.vmem_to_hbm [thread:$0]  %s224, 64, %s6, [#allocation10]
    $region41: #{tpu_custom_call.1} parent=1 // pred_fallthru
      _
    // Predicated region
    $region42: #{tpu_custom_call.1} parent=1 // pred_check
      _
    $region43: #{tpu_custom_call.1} parent=1 // pred_check_branch
      %228 = sbr.rel (0) target = $region45
    $region44: #{tpu_custom_call.1} parent=1 // pred_region
      %229 = dma.done [#allocation4], 64
    $region45: #{tpu_custom_call.1} parent=1 // pred_fallthru
      _
    // Predicated region
    $region46: #{tpu_custom_call.1} parent=1 // pred_check
      _
    $region47: #{tpu_custom_call.1} parent=1 // pred_check_branch
      %231 = sbr.rel (0) target = $region49
    $region48: #{tpu_custom_call.1} parent=1 // pred_region
      %232 = dma.done [#allocation10], 64
    $region49: #{tpu_custom_call.1} parent=1 // pred_fallthru
      _
    %233 = vsyncpa [#allocation3], 1
    %234 = vsyncpa [#allocation6], 1
    %235 = vsyncpa [#allocation4], 1
    %236 = vsyncpa [#allocation10], 1

</llo_original>
